<compile_context>
chip_gen: v6e
topology: v6e:2x2x1
jax: 0.10.0
libtpu: 0.0.40
codegen_flags: <defaults>
</compile_context>

<pallas_src>
import math
from functools import partial

import jax
import jax.numpy as jnp
from jax.experimental import pallas as pl
from jax.experimental.pallas import tpu as pltpu


# --------------------------------------------------------------------------- #
# Kernel: broadcast one SMEM scalar into the current VMEM output block.
# --------------------------------------------------------------------------- #
def _fill_kernel(val_ref, out_ref):
    # val_ref: SMEM (1,) float32 -- the single learnable parameter.
    # out_ref: VMEM block of the logical output (full shape or a row tile).
    v = val_ref[0]                                   # one SMEM read per block
    out_ref[...] = jnp.full(out_ref.shape, v, dtype=out_ref.dtype)


_TARGET_BLOCK_BYTES = 4 << 20     # ~4 MiB/block; 2x-buffered stays < 16 MiB (v5e default)
_MAX_BLOCK_BYTES = 6 << 20        # refuse bigger blocks; XLA's fused fill is already at roofline
_SUBLANE_BY_ITEMSIZE = {4: 8, 2: 16, 1: 32}


def _pallas_fill(value, shape, dtype, core_parallel):
    """Materialize a constant-filled array of `shape`/`dtype` via a Pallas fill.

    Emits the logical shape directly (no padding, no post-slice). Falls back to
    jnp.full for shapes that cannot be tiled cleanly -- XLA's fill is already at
    the HBM-write roofline, so there is nothing to lose.
    """
    itemsize = jnp.dtype(dtype).itemsize
    nbytes = math.prod(shape) * itemsize
    ndim = len(shape)
    out_sds = jax.ShapeDtypeStruct(shape, dtype)
    val = jnp.asarray(value, dtype=jnp.float32).reshape((1,))

    # Small / medium output: one whole-array block (full dims always satisfy the
    # (8,128) rule), single invocation, zero pipeline overhead.
    if nbytes <= _TARGET_BLOCK_BYTES or ndim < 2:
        if nbytes > _MAX_BLOCK_BYTES:      # degenerate huge 1-D case
            return jnp.full(shape, value, dtype=dtype)
        return pl.pallas_call(
            _fill_kernel,
            out_shape=out_sds,
            in_specs=[pl.BlockSpec(memory_space=pltpu.SMEM)],
        )(val)

    # Large output: tile the leading (batch) dim into ~4 MiB blocks.
    lead = shape[0]
    rest = shape[1:]
    rest_bytes = math.prod(rest) * itemsize
    # If the leading dim is the second-to-last dim (rank 2), its block size must
    # be a multiple of the sublane count (dtype dependent); for rank >= 3 the
    # leading block dim is unconstrained (last two dims are kept at full extent).
    sub = _SUBLANE_BY_ITEMSIZE.get(itemsize, 8) if ndim == 2 else 1
    want = max(1, _TARGET_BLOCK_BYTES // rest_bytes)

    tb = 0
    for d in range(min(lead, want), 0, -1):
        if lead % d == 0 and d % sub == 0:
            tb = d
            break
    if tb == 0 or tb * rest_bytes > _MAX_BLOCK_BYTES:
        # Not cleanly tileable (or rows too fat): use XLA's fused fill instead of
        # reintroducing a padded slab + copy.
        return jnp.full(shape, value, dtype=dtype)

    block = (tb,) + rest
    index_map = lambda i: (i,) + (0,) * (ndim - 1)
    # CORE_PARALLEL engages both TensorCores on v7x for the writeback; the plain
    # string "parallel" is kept as the default (single-TC v5e/v6e).
    sem = pltpu.CORE_PARALLEL if core_parallel else "parallel"

    return pl.pallas_call(
        _fill_kernel,
        out_shape=out_sds,
        grid=(lead // tb,),
        in_specs=[pl.BlockSpec(memory_space=pltpu.SMEM)],
        out_specs=pl.BlockSpec(block, index_map),
        compiler_params=pltpu.CompilerParams(dimension_semantics=(sem,)),
    )(val)


# --------------------------------------------------------------------------- #
# custom_vjp: single_value is a trainable parameter in the PyTorch module, and
# pallas_call has no automatic VJP -- d single_value = sum of output cotangents.
# --------------------------------------------------------------------------- #
@partial(jax.custom_vjp, nondiff_argnums=(1, 2, 3))
def _materialized_fill(value, shape, dtype, core_parallel):
    return _pallas_fill(value, shape, dtype, core_parallel)


def _materialized_fill_fwd(value, shape, dtype, core_parallel):
    return _pallas_fill(value, shape, dtype, core_parallel), None


def _materialized_fill_bwd(shape, dtype, core_parallel, _res, g):
    return (jnp.sum(g.astype(jnp.float32)),)


_materialized_fill.defvjp(_materialized_fill_fwd, _materialized_fill_bwd)


# --------------------------------------------------------------------------- #
# Public wrapper: SingleValueBinarySelectionModel.forward
# --------------------------------------------------------------------------- #
def single_value_forward(
    single_value,
    amino_acid_indices,
    mask,
    output_dim: int = 1,
    *,
    use_pallas=None,            # None = auto-dispatch (recommended)
    out_dtype=jnp.float32,      # bf16 allowed: halves HBM writes for a write-bound fill
    core_parallel: bool = False,  # set True on v7x to use both TensorCores
):
    """Pallas implementation of SingleValueBinarySelectionModel.forward."""
    del mask  # unused, exactly like the PyTorch module
    B, L = amino_acid_indices.shape
    shape = (B, L) if output_dim == 1 else (B, L, output_dim)
    dtype = jnp.dtype(out_dtype)
    nbytes = B * L * output_dim * dtype.itemsize

    if use_pallas is None:
        # A fused jnp.full always beats a standalone Pallas fill for small
        # outputs or when the result feeds other XLA ops; only materialize with
        # Pallas for large standalone buffers.
        use_pallas = nbytes >= (4 << 20)

    if not use_pallas:
        return jnp.full(shape, single_value, dtype=dtype)

    value = jnp.asarray(single_value, jnp.float32)
    return _materialized_fill(value, shape, dtype, bool(core_parallel))


# --------------------------------------------------------------------------- #
# Self-test
# --------------------------------------------------------------------------- #
if __name__ == "__main__":
    key = jax.random.PRNGKey(0)
    k_idx, k_val = jax.random.split(key, 2)

    B, L = 2, 8
    amino_acid_indices = jax.random.randint(k_idx, (B, L), 0, 21, dtype=jnp.int32)
    mask = jnp.ones((B, L), dtype=jnp.bool_)
    # nn.Parameter(torch.tensor(0.0)); use a nonzero value so the broadcast is exercised.
    single_value = jax.random.normal(k_val, (), dtype=jnp.float32)

    # output_dim == 1, forced Pallas (single whole-array block, no grid).
    out1 = jax.block_until_ready(
        single_value_forward(single_value, amino_acid_indices, mask,
                             output_dim=1, use_pallas=True))
    assert out1.shape == (B, L) and out1.dtype == jnp.float32
    assert jnp.allclose(out1, jnp.broadcast_to(single_value, (B, L)))

    # output_dim > 1 (per-AA predictions), forced Pallas, logical shape emitted directly.
    D = 21
    outD = jax.block_until_ready(
        single_value_forward(single_value, amino_acid_indices, mask,
                             output_dim=D, use_pallas=True))
    assert outD.shape == (B, L, D) and outD.dtype == jnp.float32
    assert jnp.allclose(outD, single_value)

    # Auto-dispatch: small output -> fused jnp.full path (no standalone kernel).
    out_auto = jax.block_until_ready(
        single_value_forward(single_value, amino_acid_indices, mask, output_dim=1))
    assert out_auto.shape == (B, L) and jnp.allclose(out_auto, single_value)

    # bf16 output (halved HBM writes for a write-bound fill).
    out_bf16 = jax.block_until_ready(
        single_value_forward(single_value, amino_acid_indices, mask,
                             output_dim=D, use_pallas=True, out_dtype=jnp.bfloat16))
    assert out_bf16.dtype == jnp.bfloat16
    assert jnp.allclose(out_bf16.astype(jnp.float32),
                        jnp.asarray(single_value, jnp.bfloat16).astype(jnp.float32))

    # Larger output (8 MiB f32): exercises the tiled grid path (two 4 MiB blocks).
    Bl, Ll, Dl = 128, 512, 32
    big_idx = jnp.zeros((Bl, Ll), dtype=jnp.int32)
    big_mask = jnp.ones((Bl, Ll), dtype=jnp.bool_)
    out_big = jax.block_until_ready(
        single_value_forward(single_value, big_idx, big_mask, output_dim=Dl))
    assert out_big.shape == (Bl, Ll, Dl)
    assert jnp.allclose(out_big, single_value)

    # Gradient flows through the Pallas path via the custom VJP.
    g = jax.grad(lambda v: single_value_forward(
        v, amino_acid_indices, mask, output_dim=D, use_pallas=True).sum())(single_value)
    g = jax.block_until_ready(g)
    assert jnp.allclose(g, float(B * L * D))

    print("KERNEL_OK")
</pallas_src>

<mosaic_0001>
module attributes {stable_mosaic.version = 11 : i64} {
  func.func @_fill_kernel(%arg0: memref<1xf32, #tpu.memory_space<smem>>, %arg1: memref<2x8xf32, #tpu.memory_space<vmem>>) attributes {dimension_semantics = [], scalar_prefetch = 0 : i64, scratch_operands = 0 : i64, tpu.core_type = #tpu.core_type<tc>} {
    %c0 = arith.constant 0 : index
    %0 = memref.load %arg0[%c0] : memref<1xf32, #tpu.memory_space<smem>>
    %1 = vector.broadcast %0 : f32 to vector<2x8xf32>
    %c0_0 = arith.constant 0 : index
    %c0_1 = arith.constant 0 : index
    %2 = vector.load %arg1[%c0_0, %c0_1] : memref<2x8xf32, #tpu.memory_space<vmem>>, vector<2x8xf32>
    tpu.vector_store %arg1[%c0_0, %c0_1], %1 {strides = array<i32>} : memref<2x8xf32, #tpu.memory_space<vmem>>, vector<2x8xf32>,
    return
  }
}

</mosaic_0001>

<llo_original>
// kernel: tpu_custom_call.1
$region0: #{tpu_custom_call.1}
  #allocation0 [shape = 'u32[]', space=smem, size = 0x4, offset = 0x4, fixed_abs, tag = 'smem constant byte address 0x4 - core index']
  #allocation1 [shape = 'u32[144,128]{1,0:T(1,128)}', space=vmem, size = 0x12000, scoped, tag = 'internal scratch']
  #allocation2 [shape = 'f32[1]{0:T(128)S(6)}', space=smem, size = 0x200, scoped, tag = 'scoped memory for tpu_custom_call.1']
  %s0 = inlined_call_operand.<no memory space> [shape: f32[1], index: 0, kind: input, shape index: {}]
  %s1 = inlined_call_operand.hbm [shape: f32[2,8], index: 1, kind: output, shape index: {}]
  %s2 = sld [smem:[#allocation0]]
  $region14: #{tpu_custom_call.1} parent=0
    _
  %s4 = ssub.s32 1, %s2
  %s5 = scalar_select 0, %s4, %s2
  %6 = sst [smem:[#allocation2]] %s0
  $region1: #{tpu_custom_call.1} parent=0
    #allocation3 [shape = 'u8[1024]{0}', space=vmem, size = 0x400, scoped, tag = 'output window, operand 0, single buffered']
    #allocation4 [shape = 's32[1]{0}', space=sflag, size = 0x4, scoped, tag = 'scoped memory for tpu_custom_call.1']
    %7 = vsyncpa [#allocation4], 0
    // Predicated region
    $region2: #{tpu_custom_call.1} parent=1 // pred_check
      _
    $region3: #{tpu_custom_call.1} parent=1 // pred_check_branch
      %9 = sbr.rel (0) target = $region5
    $region4: #{tpu_custom_call.1} parent=1 // pred_region
      _
    $region5: #{tpu_custom_call.1} parent=1 // pred_fallthru
      _
    %s10 = sld [smem:[#allocation2]]
    %v11 = vstv %s10
    %vm12 = vcmask 58368
    %13 = vst.msk [vmem:[#allocation3] sm:$0x3] %vm12, %v11
    // Predicated region
    $region6: #{tpu_custom_call.1} parent=1 // pred_check
      _
    $region7: #{tpu_custom_call.1} parent=1 // pred_check_branch
      %15 = sbr.rel (0) target = $region9
    $region8: #{tpu_custom_call.1} parent=1 // pred_region
      %s17 = ssub.s32 32, 32
      %18 = vsyncadd [#allocation4], %s17
      %s20 = sshll.u32 [#allocation3], 4
      %s21 = int_to_ptr.vmem [resolvable:$true] %s20
      %23 = dma.vmem_to_hbm [thread:$0]  %s21, 32, %s1, [#allocation4]
    $region9: #{tpu_custom_call.1} parent=1 // pred_fallthru
      _
    // Predicated region
    $region10: #{tpu_custom_call.1} parent=1 // pred_check
      _
    $region11: #{tpu_custom_call.1} parent=1 // pred_check_branch
      %25 = sbr.rel (0) target = $region13
    $region12: #{tpu_custom_call.1} parent=1 // pred_region
      %26 = dma.done [#allocation4], 32
    $region13: #{tpu_custom_call.1} parent=1 // pred_fallthru
      _
    %27 = vsyncpa [#allocation4], 1

</llo_original>
